<compile_context>
chip_gen: v7x
topology: tpu7x:2x2x1
jax: 0.10.0
libtpu: 0.0.40
codegen_flags: <defaults>
</compile_context>

<pallas_src>
import functools
import math

import jax
import jax.numpy as jnp
from jax.experimental import pallas as pl
from jax.experimental.pallas import tpu as pltpu

_EPS = 1e-5                        # torch.nn.LayerNorm default eps
_INV_SQRT2 = 1.0 / math.sqrt(2.0)

_HAS_BUFFERED = hasattr(pl, "Buffered")


def _round_up(a, b):
    return ((a + b - 1) // b) * b


def _layernorm(h, gamma, beta):
    """f32 LayerNorm over last dim, two-pass (centered) variance — matches torch."""
    mu = jnp.mean(h, axis=-1, keepdims=True)
    d = h - mu
    var = jnp.mean(d * d, axis=-1, keepdims=True)
    return d * jax.lax.rsqrt(var + _EPS) * gamma + beta


def _projector_kernel(x_ref, w1_ref, w3_ref, vec_ref, o_ref, h_ref, acc_ref,
                      *, approx_gelu):
    k = pl.program_id(1)
    nk = pl.num_programs(1)
    tk = w3_ref.shape[0]                  # static K-chunk size of W3

    # Packed per-feature vectors: rows 0..5 = b1, ln1_g, ln1_b, b3, ln2_g, ln2_b (f32).
    vecs = vec_ref[...]
    b1, g1, be1 = vecs[0:1, :], vecs[1:2, :], vecs[2:3, :]
    b3, g2, be2 = vecs[3:4, :], vecs[4:5, :], vecs[5:6, :]

    # First K step of this row tile: matmul1 + LN1 + GELU, stash bf16 activations,
    # zero the matmul2 accumulator.
    @pl.when(k == 0)
    def _():
        h = jnp.dot(x_ref[...], w1_ref[...],
                    preferred_element_type=jnp.float32) + b1
        h = _layernorm(h, g1, be1)
        if approx_gelu:
            h = jax.nn.gelu(h, approximate=True)          # tanh -> EUP slot
        else:
            h = 0.5 * h * (1.0 + jax.lax.erf(h * _INV_SQRT2))  # exact torch GELU
        h_ref[...] = h.astype(h_ref.dtype)
        acc_ref[...] = jnp.zeros_like(acc_ref)

    # K-streamed matmul2: acc += GELU(h)[:, k-chunk] @ W3[k-chunk, :]
    if tk == h_ref.shape[1]:
        lhs = h_ref[...]
    else:
        start = pl.multiple_of(k * tk, tk)
        lhs = h_ref[:, pl.ds(start, tk)]
    acc_ref[...] += jnp.dot(lhs, w3_ref[...], preferred_element_type=jnp.float32)

    # Last K step: bias + LN2, store the output tile.
    @pl.when(k == nk - 1)
    def _():
        h2 = acc_ref[...] + b3
        h2 = _layernorm(h2, g2, be2)
        o_ref[...] = h2.astype(o_ref.dtype)


def _const_spec(shape):
    """BlockSpec for a grid-invariant (weight / bias) input."""
    index_map = lambda i, k: (0,) * len(shape)
    if _HAS_BUFFERED:
        # Constant index map => never re-fetched; one VMEM buffer is enough.
        return pl.BlockSpec(shape, index_map, pipeline_mode=pl.Buffered(1))
    return pl.BlockSpec(shape, index_map)


def _physical_vmem_bytes():
    try:
        return int(pltpu.get_tpu_info().vmem_capacity_bytes)
    except Exception:  # hardware-info query only; be conservative (v7x per-TC VMEM)
        return 64 * 1024 * 1024


def _default_row_tile():
    # v7x (64 MiB per-TC VMEM): 128 rows.  v5e/v6e (128 MiB): 384 rows to amortize
    # per-step pipeline overhead.
    return 384 if _physical_vmem_bytes() >= (100 << 20) else 128


def _pick_row_tile(m, row_tile):
    row_tile = max(8, (row_tile // 8) * 8)
    if m >= 2 * row_tile:
        return row_tile
    # Small problem: split rows into ~2 tiles so the parallel grid axis has >=2 steps
    # (keeps both v7x TensorCores busy); never below the 8-sublane minimum.
    return min(row_tile, max(8, _round_up(max(m // 2, 1), 8)))


def _pick_k_tile(dt):
    """K-chunk size for streaming W3."""
    if dt <= 1024:
        return dt                          # small Dt: single step, W3 effectively resident
    for tk in (512, 256, 128):
        if dt % tk == 0:
            return tk
    return dt                              # irregular Dt: fall back to full-K


def _vmem_limit_bytes(tile, dv, dt, tk, x_item, out_item, w1_bufs):
    w1 = w1_bufs * dv * dt * 2                         # bf16 W1 (resident)
    w3 = 2 * tk * dt * 2                               # double-buffered bf16 W3 chunk
    vecs = w1_bufs * 8 * dt * 4                        # packed bias/LN tile
    x_io = 2 * tile * dv * x_item                      # double-buffered input stream
    out_io = 2 * tile * dt * out_item                  # double-buffered output stream
    scratch = tile * dt * (2 + 4)                      # bf16 h scratch + f32 accumulator
    working = 3 * tile * dt * 4                        # live f32 temporaries (LN/GELU pass)
    est = w1 + w3 + vecs + x_io + out_io + scratch + working
    phys = _physical_vmem_bytes()
    return int(min(max(int(est * 1.25), 32 * 1024 * 1024), int(phys * 0.9)))


def _build_call(m_pad, tile, dv, dt, tk, out_dtype, approx_gelu):
    in_specs = [
        pl.BlockSpec((tile, dv), lambda i, k: (i, 0)),   # x row tile (bf16, streamed)
        _const_spec((dv, dt)),                           # W1 (bf16, resident)
        pl.BlockSpec((tk, dt), lambda i, k: (k, 0)),     # W3 K-chunk (bf16, streamed)
        _const_spec((8, dt)),                            # packed biases / LN params
    ]
    out_spec = pl.BlockSpec((tile, dt), lambda i, k: (i, 0))
    vmem_limit = _vmem_limit_bytes(
        tile, dv, dt, tk, 2, jnp.dtype(out_dtype).itemsize,
        1 if _HAS_BUFFERED else 2)
    return pl.pallas_call(
        functools.partial(_projector_kernel, approx_gelu=approx_gelu),
        out_shape=jax.ShapeDtypeStruct((m_pad, dt), out_dtype),
        grid_spec=pltpu.PrefetchScalarGridSpec(
            num_scalar_prefetch=0,
            grid=(m_pad // tile, dt // tk),
            in_specs=in_specs,
            out_specs=out_spec,
            scratch_shapes=[
                pltpu.VMEM((tile, dt), jnp.bfloat16),    # GELU output (matmul2 LHS)
                pltpu.VMEM((tile, dt), jnp.float32),     # matmul2 accumulator
            ],
        ),
        compiler_params=pltpu.CompilerParams(
            dimension_semantics=("parallel", "arbitrary"),
            vmem_limit_bytes=vmem_limit,
        ),
    )


def llava_projector_yivl(image_features, params, *, row_tile=None, out_dtype=None,
                         approximate_gelu=True):
    """image_features: (batch, seq, Dv). Returns (batch, seq, Dt)."""
    w1, b1, g1, be1, w3, b3, g2, be2 = params
    B, S, Dv = image_features.shape
    Dt = w1.shape[1]
    M = B * S

    if out_dtype is None:
        out_dtype = image_features.dtype
    if row_tile is None:
        row_tile = _default_row_tile()
    tile = _pick_row_tile(M, row_tile)
    M_pad = _round_up(M, tile)
    tk = _pick_k_tile(Dt)

    # bf16 activations / weights for the MXU; f32 accumulation stays inside the kernel.
    # Wrapper-side cast halves the x HBM read and input double buffer.
    x2d = image_features.reshape(M, Dv).astype(jnp.bfloat16)
    if M_pad != M:
        x2d = jnp.pad(x2d, ((0, M_pad - M), (0, 0)))     # zero rows dropped after the call
    w1_b = w1.astype(jnp.bfloat16)
    w3_b = w3.astype(jnp.bfloat16)

    # Pack the six (Dt,) vectors into one 8-sublane f32 tile: one DMA instead of six.
    vecs = jnp.concatenate(
        [v.reshape(1, Dt).astype(jnp.float32) for v in (b1, g1, be1, b3, g2, be2)]
        + [jnp.zeros((2, Dt), jnp.float32)],
        axis=0,
    )

    out2d = _build_call(M_pad, tile, Dv, Dt, tk, out_dtype, approximate_gelu)(
        x2d, w1_b, w3_b, vecs)

    if M_pad != M:
        out2d = out2d[:M]
    return out2d.reshape(B, S, Dt)


def init_params(key, vision_hidden, text_hidden):
    """Deterministic synthetic parameters (shapes per module __init__)."""
    ks = jax.random.split(key, 6)
    lim1 = 1.0 / math.sqrt(vision_hidden)
    lim3 = 1.0 / math.sqrt(text_hidden)
    w1 = jax.random.uniform(ks[0], (vision_hidden, text_hidden), jnp.float32, -lim1, lim1)
    b1 = jax.random.uniform(ks[1], (text_hidden,), jnp.float32, -lim1, lim1)
    w3 = jax.random.uniform(ks[2], (text_hidden, text_hidden), jnp.float32, -lim3, lim3)
    b3 = jax.random.uniform(ks[3], (text_hidden,), jnp.float32, -lim3, lim3)
    g1 = 1.0 + 0.1 * jax.random.normal(ks[4], (text_hidden,), jnp.float32)
    be1 = 0.05 * jax.random.normal(ks[5], (text_hidden,), jnp.float32)
    g2 = jnp.ones((text_hidden,), jnp.float32) * 0.9
    be2 = jnp.full((text_hidden,), 0.01, jnp.float32)
    return (w1, b1, g1, be1, w3, b3, g2, be2)


def _reference(x, params):
    w1, b1, g1, be1, w3, b3, g2, be2 = params
    h = x @ w1 + b1
    mu = h.mean(-1, keepdims=True)
    var = ((h - mu) ** 2).mean(-1, keepdims=True)
    h = (h - mu) / jnp.sqrt(var + _EPS) * g1 + be1
    h = 0.5 * h * (1.0 + jax.lax.erf(h / jnp.sqrt(2.0)))   # exact torch nn.GELU()
    h = h @ w3 + b3
    mu = h.mean(-1, keepdims=True)
    var = ((h - mu) ** 2).mean(-1, keepdims=True)
    h = (h - mu) / jnp.sqrt(var + _EPS) * g2 + be2
    return h


if __name__ == "__main__":
    key = jax.random.PRNGKey(0)
    k_x, k_x2, k_x3, k_p, k_p3 = jax.random.split(key, 5)

    # --- Test 1: small shapes, f32 out, default (tanh) GELU -----------------------------
    batch, seq = 2, 8
    vision_hidden, text_hidden = 32, 64
    image_features = jax.random.normal(k_x, (batch, seq, vision_hidden), jnp.float32)
    params = init_params(k_p, vision_hidden, text_hidden)

    out = jax.block_until_ready(llava_projector_yivl(image_features, params))
    ref = _reference(image_features, params)
    assert out.shape == (batch, seq, text_hidden)
    # bf16 MXU matmuls (f32 accumulate) + tanh-GELU vs all-f32 erf reference.
    assert jnp.allclose(out, ref, atol=5e-2, rtol=5e-2), float(jnp.max(jnp.abs(out - ref)))

    # --- Test 2: ragged row count (padding path), exact GELU, bf16 output ---------------
    x2 = jax.random.normal(k_x2, (3, 19, vision_hidden), jnp.float32)
    out2 = jax.block_until_ready(
        llava_projector_yivl(x2, params, out_dtype=jnp.bfloat16, approximate_gelu=False))
    ref2 = _reference(x2, params)
    assert out2.shape == (3, 19, text_hidden)
    assert out2.dtype == jnp.bfloat16
    assert jnp.allclose(out2.astype(jnp.float32), ref2, atol=1e-1, rtol=5e-2), \
        float(jnp.max(jnp.abs(out2.astype(jnp.float32) - ref2)))

    # --- Test 3: Dt > 1024 exercises the K-streamed W3 / accumulator path ---------------
    dv3, dt3 = 192, 1536                     # tk = 512 -> 3 K steps on the arbitrary axis
    x3 = jax.random.normal(k_x3, (1, 64, dv3), jnp.float32)
    params3 = init_params(k_p3, dv3, dt3)
    out3 = jax.block_until_ready(llava_projector_yivl(x3, params3))
    ref3 = _reference(x3, params3)
    assert out3.shape == (1, 64, dt3)
    assert jnp.allclose(out3, ref3, atol=1e-1, rtol=1e-1), \
        float(jnp.max(jnp.abs(out3 - ref3)))

    print("KERNEL_OK")
</pallas_src>

<mosaic_0001>
module attributes {stable_mosaic.version = 11 : i64} {
  func.func @_projector_kernel(%arg0: i32, %arg1: i32, %arg2: memref<8x32xbf16, #tpu.memory_space<vmem>>, %arg3: memref<32x64xbf16, #tpu.memory_space<vmem>>, %arg4: memref<64x64xbf16, #tpu.memory_space<vmem>>, %arg5: memref<8x64xf32, #tpu.memory_space<vmem>>, %arg6: memref<8x64xf32, #tpu.memory_space<vmem>>, %arg7: memref<8x64xbf16, #tpu.memory_space<vmem>>, %arg8: memref<8x64xf32, #tpu.memory_space<vmem>>) attributes {dimension_semantics = [#tpu.dimension_semantics<parallel>, #tpu.dimension_semantics<arbitrary>], iteration_bounds = array<i64: 2, 1>, scalar_prefetch = 0 : i64, scratch_operands = 2 : i64, tpu.core_type = #tpu.core_type<tc>, window_params = [{transform_indices = @transform_0, window_bounds = array<i64: 8, 32>}, {pipeline_mode = #tpu.pipeline_mode<synchronous>, transform_indices = @transform_1, window_bounds = array<i64: 32, 64>}, {transform_indices = @transform_2, window_bounds = array<i64: 64, 64>}, {pipeline_mode = #tpu.pipeline_mode<synchronous>, transform_indices = @transform_3, window_bounds = array<i64: 8, 64>}, {transform_indices = @transform_4, window_bounds = array<i64: 8, 64>}]} {
    %c0 = arith.constant 0 : index
    %c0_0 = arith.constant 0 : index
    %0 = vector.load %arg5[%c0, %c0_0] : memref<8x64xf32, #tpu.memory_space<vmem>>, vector<8x64xf32>
    %1 = vector.extract_strided_slice %0 {offsets = [0, 0], sizes = [1, 64], strides = [1, 1]} : vector<8x64xf32> to vector<1x64xf32>
    %2 = vector.extract_strided_slice %0 {offsets = [1, 0], sizes = [1, 64], strides = [1, 1]} : vector<8x64xf32> to vector<1x64xf32>
    %3 = vector.extract_strided_slice %0 {offsets = [2, 0], sizes = [1, 64], strides = [1, 1]} : vector<8x64xf32> to vector<1x64xf32>
    %4 = vector.extract_strided_slice %0 {offsets = [3, 0], sizes = [1, 64], strides = [1, 1]} : vector<8x64xf32> to vector<1x64xf32>
    %5 = vector.extract_strided_slice %0 {offsets = [4, 0], sizes = [1, 64], strides = [1, 1]} : vector<8x64xf32> to vector<1x64xf32>
    %6 = vector.extract_strided_slice %0 {offsets = [5, 0], sizes = [1, 64], strides = [1, 1]} : vector<8x64xf32> to vector<1x64xf32>
    %c0_i32 = arith.constant 0 : i32
    %7 = arith.cmpi eq, %arg1, %c0_i32 : i32
    %8 = arith.extui %7 : i1 to i32
    %c0_i32_1 = arith.constant 0 : i32
    %9 = arith.cmpi ne, %8, %c0_i32_1 : i32
    scf.if %9 {
      %c0_12 = arith.constant 0 : index
      %c0_13 = arith.constant 0 : index
      %19 = vector.load %arg2[%c0_12, %c0_13] : memref<8x32xbf16, #tpu.memory_space<vmem>>, vector<8x32xbf16>
      %c0_14 = arith.constant 0 : index
      %c0_15 = arith.constant 0 : index
      %20 = vector.load %arg3[%c0_14, %c0_15] : memref<32x64xbf16, #tpu.memory_space<vmem>>, vector<32x64xbf16>
      %cst_16 = arith.constant dense<0.000000e+00> : vector<8x64xf32>
      %21 = tpu.matmul %19, %20, %cst_16 {dimension_numbers = #tpu.dot_dimension_numbers<[1], [0], [0], [1], [0, 0, 1, 1], [], []>} : vector<8x32xbf16>, vector<32x64xbf16>, vector<8x64xf32> -> vector<8x64xf32>
      %22 = vector.broadcast %1 : vector<1x64xf32> to vector<8x64xf32>
      %23 = arith.addf %21, %22 : vector<8x64xf32>
      %cst_17 = arith.constant dense<0.000000e+00> : vector<8xf32>
      %24 = vector.multi_reduction <add>, %23, %cst_17 [1] : vector<8x64xf32> to vector<8xf32>
      %25 = vector.shape_cast %24 : vector<8xf32> to vector<8x1xf32>
      %cst_18 = arith.constant 6.400000e+01 : f32
      %26 = vector.broadcast %cst_18 : f32 to vector<8x1xf32>
      %27 = arith.divf %25, %26 : vector<8x1xf32>
      %28 = vector.broadcast %27 : vector<8x1xf32> to vector<8x64xf32>
      %29 = arith.subf %23, %28 : vector<8x64xf32>
      %30 = arith.mulf %29, %29 : vector<8x64xf32>
      %cst_19 = arith.constant dense<0.000000e+00> : vector<8xf32>
      %31 = vector.multi_reduction <add>, %30, %cst_19 [1] : vector<8x64xf32> to vector<8xf32>
      %32 = vector.shape_cast %31 : vector<8xf32> to vector<8x1xf32>
      %cst_20 = arith.constant 6.400000e+01 : f32
      %33 = vector.broadcast %cst_20 : f32 to vector<8x1xf32>
      %34 = arith.divf %32, %33 : vector<8x1xf32>
      %cst_21 = arith.constant 9.99999974E-6 : f32
      %35 = vector.broadcast %cst_21 : f32 to vector<8x1xf32>
      %36 = arith.addf %34, %35 : vector<8x1xf32>
      %37 = math.rsqrt %36 : vector<8x1xf32>
      %38 = vector.broadcast %37 : vector<8x1xf32> to vector<8x64xf32>
      %39 = arith.mulf %29, %38 : vector<8x64xf32>
      %40 = vector.broadcast %2 : vector<1x64xf32> to vector<8x64xf32>
      %41 = arith.mulf %39, %40 : vector<8x64xf32>
      %42 = vector.broadcast %3 : vector<1x64xf32> to vector<8x64xf32>
      %43 = arith.addf %41, %42 : vector<8x64xf32>
      %44 = arith.mulf %43, %43 : vector<8x64xf32>
      %45 = arith.mulf %43, %44 : vector<8x64xf32>
      %cst_22 = arith.constant 4.471500e-02 : f32
      %46 = vector.broadcast %cst_22 : f32 to vector<8x64xf32>
      %47 = arith.mulf %46, %45 : vector<8x64xf32>
      %48 = arith.addf %43, %47 : vector<8x64xf32>
      %cst_23 = arith.constant 0.797884583 : f32
      %49 = vector.broadcast %cst_23 : f32 to vector<8x64xf32>
      %50 = arith.mulf %49, %48 : vector<8x64xf32>
      %51 = math.tanh %50 : vector<8x64xf32>
      %cst_24 = arith.constant 1.000000e+00 : f32
      %52 = vector.broadcast %cst_24 : f32 to vector<8x64xf32>
      %53 = arith.addf %52, %51 : vector<8x64xf32>
      %cst_25 = arith.constant 5.000000e-01 : f32
      %54 = vector.broadcast %cst_25 : f32 to vector<8x64xf32>
      %55 = arith.mulf %54, %53 : vector<8x64xf32>
      %56 = arith.mulf %43, %55 : vector<8x64xf32>
      %57 = arith.truncf %56 : vector<8x64xf32> to vector<8x64xbf16>
      %c0_26 = arith.constant 0 : index
      %c0_27 = arith.constant 0 : index
      %58 = vector.load %arg7[%c0_26, %c0_27] : memref<8x64xbf16, #tpu.memory_space<vmem>>, vector<8x64xbf16>
      tpu.vector_store %arg7[%c0_26, %c0_27], %57 {strides = array<i32>} : memref<8x64xbf16, #tpu.memory_space<vmem>>, vector<8x64xbf16>,
      %cst_28 = arith.constant 0.000000e+00 : f32
      %59 = vector.broadcast %cst_28 : f32 to vector<8x64xf32>
      %c0_29 = arith.constant 0 : index
      %c0_30 = arith.constant 0 : index
      %60 = vector.load %arg8[%c0_29, %c0_30] : memref<8x64xf32, #tpu.memory_space<vmem>>, vector<8x64xf32>
      tpu.vector_store %arg8[%c0_29, %c0_30], %59 {strides = array<i32>} : memref<8x64xf32, #tpu.memory_space<vmem>>, vector<8x64xf32>,
    } else {
    }
    %c0_2 = arith.constant 0 : index
    %c0_3 = arith.constant 0 : index
    %10 = vector.load %arg7[%c0_2, %c0_3] : memref<8x64xbf16, #tpu.memory_space<vmem>>, vector<8x64xbf16>
    %c0_4 = arith.constant 0 : index
    %c0_5 = arith.constant 0 : index
    %11 = vector.load %arg8[%c0_4, %c0_5] : memref<8x64xf32, #tpu.memory_space<vmem>>, vector<8x64xf32>
    %c0_6 = arith.constant 0 : index
    %c0_7 = arith.constant 0 : index
    %12 = vector.load %arg4[%c0_6, %c0_7] : memref<64x64xbf16, #tpu.memory_space<vmem>>, vector<64x64xbf16>
    %cst = arith.constant dense<0.000000e+00> : vector<8x64xf32>
    %13 = tpu.matmul %10, %12, %cst {dimension_numbers = #tpu.dot_dimension_numbers<[1], [0], [0], [1], [0, 0, 1, 1], [], []>} : vector<8x64xbf16>, vector<64x64xbf16>, vector<8x64xf32> -> vector<8x64xf32>
    %14 = arith.addf %11, %13 : vector<8x64xf32>
    %c0_8 = arith.constant 0 : index
    %c0_9 = arith.constant 0 : index
    %15 = vector.load %arg8[%c0_8, %c0_9] : memref<8x64xf32, #tpu.memory_space<vmem>>, vector<8x64xf32>
    tpu.vector_store %arg8[%c0_8, %c0_9], %14 {strides = array<i32>} : memref<8x64xf32, #tpu.memory_space<vmem>>, vector<8x64xf32>,
    %c0_i32_10 = arith.constant 0 : i32
    %16 = arith.cmpi eq, %arg1, %c0_i32_10 : i32
    %17 = arith.extui %16 : i1 to i32
    %c0_i32_11 = arith.constant 0 : i32
    %18 = arith.cmpi ne, %17, %c0_i32_11 : i32
    scf.if %18 {
      %c0_12 = arith.constant 0 : index
      %c0_13 = arith.constant 0 : index
      %19 = vector.load %arg8[%c0_12, %c0_13] : memref<8x64xf32, #tpu.memory_space<vmem>>, vector<8x64xf32>
      %20 = vector.broadcast %4 : vector<1x64xf32> to vector<8x64xf32>
      %21 = arith.addf %19, %20 : vector<8x64xf32>
      %cst_14 = arith.constant dense<0.000000e+00> : vector<8xf32>
      %22 = vector.multi_reduction <add>, %21, %cst_14 [1] : vector<8x64xf32> to vector<8xf32>
      %23 = vector.shape_cast %22 : vector<8xf32> to vector<8x1xf32>
      %cst_15 = arith.constant 6.400000e+01 : f32
      %24 = vector.broadcast %cst_15 : f32 to vector<8x1xf32>
      %25 = arith.divf %23, %24 : vector<8x1xf32>
      %26 = vector.broadcast %25 : vector<8x1xf32> to vector<8x64xf32>
      %27 = arith.subf %21, %26 : vector<8x64xf32>
      %28 = arith.mulf %27, %27 : vector<8x64xf32>
      %cst_16 = arith.constant dense<0.000000e+00> : vector<8xf32>
      %29 = vector.multi_reduction <add>, %28, %cst_16 [1] : vector<8x64xf32> to vector<8xf32>
      %30 = vector.shape_cast %29 : vector<8xf32> to vector<8x1xf32>
      %cst_17 = arith.constant 6.400000e+01 : f32
      %31 = vector.broadcast %cst_17 : f32 to vector<8x1xf32>
      %32 = arith.divf %30, %31 : vector<8x1xf32>
      %cst_18 = arith.constant 9.99999974E-6 : f32
      %33 = vector.broadcast %cst_18 : f32 to vector<8x1xf32>
      %34 = arith.addf %32, %33 : vector<8x1xf32>
      %35 = math.rsqrt %34 : vector<8x1xf32>
      %36 = vector.broadcast %35 : vector<8x1xf32> to vector<8x64xf32>
      %37 = arith.mulf %27, %36 : vector<8x64xf32>
      %38 = vector.broadcast %5 : vector<1x64xf32> to vector<8x64xf32>
      %39 = arith.mulf %37, %38 : vector<8x64xf32>
      %40 = vector.broadcast %6 : vector<1x64xf32> to vector<8x64xf32>
      %41 = arith.addf %39, %40 : vector<8x64xf32>
      %c0_19 = arith.constant 0 : index
      %c0_20 = arith.constant 0 : index
      %42 = vector.load %arg6[%c0_19, %c0_20] : memref<8x64xf32, #tpu.memory_space<vmem>>, vector<8x64xf32>
      tpu.vector_store %arg6[%c0_19, %c0_20], %41 {strides = array<i32>} : memref<8x64xf32, #tpu.memory_space<vmem>>, vector<8x64xf32>,
    } else {
    }
    return
  }
  func.func @transform_0(%arg0: i32, %arg1: i32) -> (i32, i32) {
    %c0_i32 = arith.constant 0 : i32
    %c0_i32_0 = arith.constant 0 : i32
    return %arg0, %c0_i32 : i32, i32
  }
  func.func @transform_1(%arg0: i32, %arg1: i32) -> (i32, i32) {
    %c0_i32 = arith.constant 0 : i32
    %c0_i32_0 = arith.constant 0 : i32
    %c0_i32_1 = arith.constant 0 : i32
    return %c0_i32, %c0_i32_0 : i32, i32
  }
  func.func @transform_2(%arg0: i32, %arg1: i32) -> (i32, i32) {
    %c0_i32 = arith.constant 0 : i32
    %c0_i32_0 = arith.constant 0 : i32
    return %arg1, %c0_i32 : i32, i32
  }
  func.func @transform_3(%arg0: i32, %arg1: i32) -> (i32, i32) {
    %c0_i32 = arith.constant 0 : i32
    %c0_i32_0 = arith.constant 0 : i32
    %c0_i32_1 = arith.constant 0 : i32
    return %c0_i32, %c0_i32_0 : i32, i32
  }
  func.func @transform_4(%arg0: i32, %arg1: i32) -> (i32, i32) {
    %c0_i32 = arith.constant 0 : i32
    %c0_i32_0 = arith.constant 0 : i32
    return %arg0, %c0_i32 : i32, i32
  }
}

</mosaic_0001>

<llo_original>
// kernel: tpu_custom_call.1
$region0: #{tpu_custom_call.1}
  #allocation0 [shape = 'u32[]', space=smem, size = 0x4, offset = 0x4, fixed_abs, tag = 'smem constant byte address 0x4 - core index']
  #allocation1 [shape = 'u32[144,128]{1,0:T(1,128)}', space=vmem, size = 0x12000, scoped, tag = 'internal scratch']
  #allocation2 [shape = 'bf16[8,64]{1,0:T(8,128)(2,1)}', space=vmem, size = 0x800, scoped, tag = 'scratch operand']
  #allocation3 [shape = 'f32[8,64]{1,0:T(8,128)}', space=vmem, size = 0x1000, scoped, tag = 'scratch operand']
  %s0 = inlined_call_operand.hbm [shape: bf16[16,32], index: 0, kind: input, shape index: {}]
  %s1 = inlined_call_operand.hbm [shape: bf16[32,64], index: 1, kind: input, shape index: {}]
  %s2 = inlined_call_operand.hbm [shape: bf16[64,64], index: 2, kind: input, shape index: {}]
  %s3 = inlined_call_operand.vmem [shape: f32[8,64], index: 3, kind: input, shape index: {}]
  %s4 = inlined_call_operand.hbm [shape: f32[16,64], index: 4, kind: output, shape index: {}]
  %s5 = sld [smem:[#allocation0]]
  $region69: #{tpu_custom_call.1} parent=0
    _
  %s7 = ssub.s32 1, %s5
  %s8 = scalar_select 0, %s7, %s5
  $region1: #{tpu_custom_call.1} parent=0
    #allocation4 [shape = 'u8[4096]{0}', space=vmem, size = 0x1000, scoped, tag = 'input window, operand 0']
    #allocation5 [shape = 's32[2]{0}', space=sflag, size = 0x8, scoped, tag = 'scoped memory for tpu_custom_call.1']
    #allocation6 [shape = 's32[2]{0}', space=sflag, size = 0x8, scoped, tag = 'scoped memory for tpu_custom_call.1']
    #allocation7 [shape = 'u8[8192]{0}', space=vmem, size = 0x2000, scoped, tag = 'input window, operand 1, single buffered']
    #allocation8 [shape = 's32[1]{0}', space=sflag, size = 0x4, scoped, tag = 'scoped memory for tpu_custom_call.1']
    #allocation9 [shape = 'u8[16384]{0}', space=vmem, size = 0x4000, scoped, tag = 'input window, operand 2, single buffered']
    #allocation10 [shape = 'u8[8192]{0}', space=vmem, size = 0x2000, scoped, tag = 'output window, operand 0']
    %9 = vsyncpa [#allocation5], 0
    %s10 = scalar_lea.sflag [#allocation5], 1
    %11 = vsyncpa %s10, 0
    %12 = vsyncpa [#allocation8], 0
    %13 = vsyncpa [#allocation6], 0
    %s14 = scalar_lea.sflag [#allocation6], 1
    %15 = vsyncpa %s14, 0
    loop: start=0, step=1, limit=4
    $region2: #{tpu_custom_call.1} parent=1 // loop_pre_header
      _
    $region3: #{tpu_custom_call.1} parent=1 // loop_header
      %s17 = sphi 0, %s21
      %p18 = scmp.ge.s32.totalorder %s17, 4
      %s24 = sphi 0, %s36
      %s25 = sphi 0, %s32
      %s26 = sphi 0, %s24
      %s27 = sphi 0, %s25
      %s28 = sphi 0, %s26
      %s29 = sphi 0, %s27
      %s39 = sphi 0, %s41
      %s42 = sphi 0, %s39
      %s43 = sphi 0, %s42
      %s59 = sphi 0, %s43
      %s63 = sphi 0, %s63
      %s65 = sphi 0, %s63
      %s66 = sphi 0, %s65
      %s80 = sphi 0, %s66
      %s86 = sphi 0, %s88
      %s89 = sphi 0, %s86
      %s90 = sphi 0, %s89
      %s106 = sphi 0, %s90
      %s110 = sphi 0, %s110
      %s112 = sphi 0, %s110
      %s113 = sphi 0, %s112
      %s127 = sphi 0, %s113
      %s133 = sphi 0, %s135
      %s136 = sphi 0, %s133
      %s137 = sphi 0, %s136
      %s153 = sphi 0, %s137
    $region4: #{tpu_custom_call.1} parent=1 // loop_header_branch
      %20 = sbr.rel (%p18) target = $region8
    $region5: #{tpu_custom_call.1} parent=1 // loop_body
      %s22 = ssub.s32 %s17, 1
      %s23 = ssub.s32 %s17, 2
      %s30 = sadd.s32 1, %s25
      %p31 = scmp.ge.s32.totalorder %s30, 1
      %s32 = scalar_select %p31, 0, %s30
      %s33 = sadd.s32 1, %s24
      %s34 = scalar_select %p31, %s33, %s24
      %p35 = scmp.ge.s32.totalorder %s34, 2
      %s36 = scalar_select %p35, 0, %s34
      %s37 = ssub.s32 %s24, %s36
      %p38 = scmp.eq.s32.totalorder %s37, 0
      %s40 = sadd.s32 %s39, 1
      %s41 = scalar_select %p38, %s39, %s40
      %p44 = pneg %p38
      %p45 = scmp.eq.s32.totalorder %s17, 1
      %p46 = por %p44, %p45
      %p47 = scmp.ne.s32.totalorder %s39, %s42
      %p48 = scmp.eq.s32.totalorder %s17, 0
      %p49 = por %p47, %p48
      %p50 = scmp.ne.s32.totalorder %s39, %s42
      %p51 = scmp.eq.s32.totalorder %s22, 1
      %p52 = por %p50, %p51
      %p53 = scmp.ne.s32.totalorder %s42, %s43
      %p54 = scmp.eq.s32.totalorder %s22, 0
      %p55 = por %p53, %p54
      %p56 = scmp.ne.s32.totalorder %s42, %s43
      %p57 = scmp.eq.s32.totalorder %s23, 1
      %p58 = por %p56, %p57
      %p60 = scmp.ne.s32.totalorder %s43, %s59
      %p61 = scmp.eq.s32.totalorder %s23, 0
      %p62 = por %p60, %p61
      %s64 = sadd.s32 %s63, 1
      %p67 = scmp.eq.s32.totalorder %s17, 1
      %p68 = scmp.ne.s32.totalorder %s63, %s65
      %p69 = scmp.eq.s32.totalorder %s17, 0
      %p70 = por %p68, %p69
      %p71 = scmp.ne.s32.totalorder %s63, %s65
      %p72 = scmp.eq.s32.totalorder %s22, 1
      %p73 = por %p71, %p72
      %p74 = scmp.ne.s32.totalorder %s65, %s66
      %p75 = scmp.eq.s32.totalorder %s22, 0
      %p76 = por %p74, %p75
      %p77 = scmp.ne.s32.totalorder %s65, %s66
      %p78 = scmp.eq.s32.totalorder %s23, 1
      %p79 = por %p77, %p78
      %p81 = scmp.ne.s32.totalorder %s66, %s80
      %p82 = scmp.eq.s32.totalorder %s23, 0
      %p83 = por %p81, %p82
      %s84 = ssub.s32 %s25, %s32
      %p85 = scmp.eq.s32.totalorder %s84, 0
      %s87 = sadd.s32 %s86, 1
      %s88 = scalar_select %p85, %s86, %s87
      %p91 = pneg %p85
      %p92 = scmp.eq.s32.totalorder %s17, 1
      %p93 = por %p91, %p92
      %p94 = scmp.ne.s32.totalorder %s86, %s89
      %p95 = scmp.eq.s32.totalorder %s17, 0
      %p96 = por %p94, %p95
      %p97 = scmp.ne.s32.totalorder %s86, %s89
      %p98 = scmp.eq.s32.totalorder %s22, 1
      %p99 = por %p97, %p98
      %p100 = scmp.ne.s32.totalorder %s89, %s90
      %p101 = scmp.eq.s32.totalorder %s22, 0
      %p102 = por %p100, %p101
      %p103 = scmp.ne.s32.totalorder %s89, %s90
      %p104 = scmp.eq.s32.totalorder %s23, 1
      %p105 = por %p103, %p104
      %p107 = scmp.ne.s32.totalorder %s90, %s106
      %p108 = scmp.eq.s32.totalorder %s23, 0
      %p109 = por %p107, %p108
      %s111 = sadd.s32 %s110, 1
      %p114 = scmp.eq.s32.totalorder %s17, 1
      %p115 = scmp.ne.s32.totalorder %s110, %s112
      %p116 = scmp.eq.s32.totalorder %s17, 0
      %p117 = por %p115, %p116
      %p118 = scmp.ne.s32.totalorder %s110, %s112
      %p119 = scmp.eq.s32.totalorder %s22, 1
      %p120 = por %p118, %p119
      %p121 = scmp.ne.s32.totalorder %s112, %s113
      %p122 = scmp.eq.s32.totalorder %s22, 0
      %p123 = por %p121, %p122
      %p124 = scmp.ne.s32.totalorder %s112, %s113
      %p125 = scmp.eq.s32.totalorder %s23, 1
      %p126 = por %p124, %p125
      %p128 = scmp.ne.s32.totalorder %s113, %s127
      %p129 = scmp.eq.s32.totalorder %s23, 0
      %p130 = por %p128, %p129
      %s131 = ssub.s32 %s24, %s36
      %p132 = scmp.eq.s32.totalorder %s131, 0
      %s134 = sadd.s32 %s133, 1
      %s135 = scalar_select %p132, %s133, %s134
      %p138 = pneg %p132
      %p139 = scmp.eq.s32.totalorder %s17, 1
      %p140 = por %p138, %p139
      %p141 = scmp.ne.s32.totalorder %s133, %s136
      %p142 = scmp.eq.s32.totalorder %s17, 0
      %p143 = por %p141, %p142
      %p144 = scmp.ne.s32.totalorder %s133, %s136
      %p145 = scmp.eq.s32.totalorder %s22, 1
      %p146 = por %p144, %p145
      %p147 = scmp.ne.s32.totalorder %s136, %s137
      %p148 = scmp.eq.s32.totalorder %s22, 0
      %p149 = por %p147, %p148
      %p150 = scmp.ne.s32.totalorder %s136, %s137
      %p151 = scmp.eq.s32.totalorder %s23, 1
      %p152 = por %p150, %p151
      %p154 = scmp.ne.s32.totalorder %s137, %s153
      %p155 = scmp.eq.s32.totalorder %s23, 0
      %p156 = por %p154, %p155
      %p157 = scmp.le.s32.totalorder 1, %s17
      %p158 = scmp.lt.s32.totalorder %s17, 3
      %p159 = pnand %p157, %p158
      %p160 = pneg %p159
      // Predicated region
      $region9: #{tpu_custom_call.1} parent=5 // pred_check
        _
      $region10: #{tpu_custom_call.1} parent=5 // pred_check_branch
        %162 = sbr.rel (%p159) target = $region12
      $region11: #{tpu_custom_call.1} parent=5 // pred_region
        %s163 = ssub.s32 %s17, 1
        // Predicated region
        $region13: #{tpu_custom_call.1} parent=11 // pred_check
          %p164 = pneg %p76
        $region14: #{tpu_custom_call.1} parent=11 // pred_check_branch
          %166 = sbr.rel (%p164) target = $region16
        $region15: #{tpu_custom_call.1} parent=11 // pred_region
          %s168 = ssub.s32 256, 256
          %169 = vsyncadd [#allocation8], %s168
          %s170 = sshll.u32 [#allocation7], 4
          %s171 = int_to_ptr.vmem [resolvable:$true] %s170
          %176 = dma.hbm_to_vmem [thread:$0]  %s1, 256, %s171, [#allocation8], 64, 64, 4
        $region16: #{tpu_custom_call.1} parent=11 // pred_fallthru
          _
        // Predicated region
        $region17: #{tpu_custom_call.1} parent=11 // pred_check
          %p177 = pneg %p102
        $region18: #{tpu_custom_call.1} parent=11 // pred_check_branch
          %179 = sbr.rel (%p177) target = $region20
        $region19: #{tpu_custom_call.1} parent=11 // pred_region
          %s180 = smul.u32 8, %s27
          %s182 = ssub.s32 512, 512
          %183 = vsyncadd [#allocation8], %s182
          %s184 = smul.addr %s180, 64
          %s185 = scalar_lea.hbm %s2, %s184
          %s186 = sshll.u32 [#allocation9], 4
          %s187 = int_to_ptr.vmem [resolvable:$true] %s186
          %192 = dma.hbm_to_vmem [thread:$0]  %s185, 512, %s187, [#allocation8], 64, 64, 4
        $region20: #{tpu_custom_call.1} parent=11 // pred_fallthru
          _
        // Predicated region
        $region21: #{tpu_custom_call.1} parent=11 // pred_check
          %p193 = pneg %p123
        $region22: #{tpu_custom_call.1} parent=11 // pred_check_branch
          %195 = sbr.rel (%p193) target = $region24
        $region23: #{tpu_custom_call.1} parent=11 // pred_region
          _
        $region24: #{tpu_custom_call.1} parent=11 // pred_fallthru
          _
      $region12: #{tpu_custom_call.1} parent=5 // pred_fallthru
        _
      %p196 = scmp.lt.s32.totalorder %s17, 2
      // Predicated region
      $region25: #{tpu_custom_call.1} parent=5 // pred_check
        %p197 = pneg %p196
      $region26: #{tpu_custom_call.1} parent=5 // pred_check_branch
        %199 = sbr.rel (%p197) target = $region28
      $region27: #{tpu_custom_call.1} parent=5 // pred_region
        // Predicated region
        $region29: #{tpu_custom_call.1} parent=27 // pred_check
          %p200 = pneg %p49
        $region30: #{tpu_custom_call.1} parent=27 // pred_check_branch
          %202 = sbr.rel (%p200) target = $region32
        $region31: #{tpu_custom_call.1} parent=27 // pred_region
          %s203 = sand.u32 %s39, 1
          %s204 = scalar_lea.sflag [#allocation5], %s203
          %s205 = sand.u32 %s39, 1
          %s206 = smul.addr %s205, 4
          %s207 = scalar_lea.vmem [#allocation4], %s206
          %s209 = ssub.s32 64, 64
          %210 = vsyncadd %s204, %s209
          %s211 = smul.addr %s24, 64
          %s212 = scalar_lea.hbm %s0, %s211
          %s214 = sshll.u32 %s207, 4
          %s215 = int_to_ptr.vmem [resolvable:$true] %s214
          %217 = dma.hbm_to_vmem [thread:$0]  %s212, 64, %s215, %s204
        $region32: #{tpu_custom_call.1} parent=27 // pred_fallthru
          _
      $region28: #{tpu_custom_call.1} parent=5 // pred_fallthru
        _
      %p218 = scmp.le.s32.totalorder 1, %s17
      %p219 = scmp.lt.s32.totalorder %s17, 3
      %p220 = pnand %p218, %p219
      %p221 = pneg %p220
      // Predicated region
      $region33: #{tpu_custom_call.1} parent=5 // pred_check
        _
      $region34: #{tpu_custom_call.1} parent=5 // pred_check_branch
        %223 = sbr.rel (%p220) target = $region36
      $region35: #{tpu_custom_call.1} parent=5 // pred_region
        %s224 = ssub.s32 %s17, 1
        %s225 = sand.u32 %s42, 1
        %s226 = scalar_lea.sflag [#allocation5], %s225
        %s227 = sand.u32 %s42, 1
        %s228 = smul.addr %s227, 4
        %s229 = scalar_lea.vmem [#allocation4], %s228
        // Predicated region
        $region37: #{tpu_custom_call.1} parent=35 // pred_check
          %p230 = pneg %p55
        $region38: #{tpu_custom_call.1} parent=35 // pred_check_branch
          %232 = sbr.rel (%p230) target = $region40
        $region39: #{tpu_custom_call.1} parent=35 // pred_region
          %233 = dma.done %s226, 64
        $region40: #{tpu_custom_call.1} parent=35 // pred_fallthru
          _
        // Predicated region
        $region41: #{tpu_custom_call.1} parent=35 // pred_check
          %p234 = pneg %p76
        $region42: #{tpu_custom_call.1} parent=35 // pred_check_branch
          %236 = sbr.rel (%p234) target = $region44
        $region43: #{tpu_custom_call.1} parent=35 // pred_region
          %237 = dma.done [#allocation8], 256
        $region44: #{tpu_custom_call.1} parent=35 // pred_fallthru
          _
        // Predicated region
        $region45: #{tpu_custom_call.1} parent=35 // pred_check
          %p238 = pneg %p102
        $region46: #{tpu_custom_call.1} parent=35 // pred_check_branch
          %240 = sbr.rel (%p238) target = $region48
        $region47: #{tpu_custom_call.1} parent=35 // pred_region
          %241 = dma.done [#allocation8], 512
        $region48: #{tpu_custom_call.1} parent=35 // pred_fallthru
          _
        %s242 = sand.u32 %s42, 1
        %s243 = scalar_lea.sflag [#allocation5], %s242
        %s244 = sand.u32 %s42, 1
        %s245 = smul.addr %s244, 4
        %s246 = scalar_lea.vmem [#allocation4], %s245
        %p247 = pneg %p55
        %p248 = pneg %p52
        %p249 = pneg %p76
        %p250 = pneg %p73
        %p251 = pneg %p102
        %p252 = pneg %p99
        %p253 = pneg %p123
        %p254 = pneg %p120
        %p255 = pneg %p149
        %p256 = pneg %p146
        %s257 = sand.u32 %s136, 1
        %s258 = scalar_lea.sflag [#allocation6], %s257
        %s259 = sand.u32 %s136, 1
        %s260 = smul.addr %s259, 8
        %s261 = scalar_lea.vmem [#allocation10], %s260
        %s262 = smul.u32 8, %s27
        %v264 = vld [vmem:[%s3] sm:$0xff]
        %p265 = scmp.eq.s32.totalorder %s27, 0
        // Predicated region
        $region49: #{tpu_custom_call.1} parent=35 // pred_check
          %p266 = pneg %p265
        $region50: #{tpu_custom_call.1} parent=35 // pred_check_branch
          %268 = sbr.rel (%p266) target = $region52
        $region51: #{tpu_custom_call.1} parent=35 // pred_region
          %v269 = vld [vmem:[%s229] sm:$0xf]
          %v270 = vld [vmem:[#allocation7] sm:$0xf]
          %v271 = vld [vmem:[#allocation7 + $0x4] sm:$0xf]
          %v272 = vld [vmem:[#allocation7 + $0x8] sm:$0xf]
          %v273 = vld [vmem:[#allocation7 + $0xc] sm:$0xf]
          %v274 = vlaneseq
          %v275 = vshrl.u32 %v274, 7
          %v276 = vsub.s32 0, %v275
          %v277 = vrot.slane %v264, %v276
          %v282 = vunpack.c.l.b16 %v270
          %v283 = vunpack.c.l.b16 %v271
          %v284 = vunpack.c.l.b16 %v272
          %v285 = vunpack.c.l.b16 %v273
          %v286 = vpack.c.b16 %v283, %v282
          %v287 = vpack.c.b16 %v285, %v284
          %vm290 = vcmask 261120
          %v292 = vsel %vm290, %v269, 0
          %294 = vmatprep.subr.bf16.mxu0 0
          %295 = vmatpush1.bf16.msra.mxu0 %v286
          %296 = vmatprep.subr.bf16.mxu0 0
          %297 = vmatpush1.bf16.msra.mxu0 %v287
          %298 = vmatprep.subr.bf16.mxu0 0
          %299 = vmatpush1.bf16.msra.mxu0 0
          %300 = vmatprep.subr.bf16.mxu0 0
          %301 = vmatpush1.bf16.msra.mxu0 0
          %302 = vmatprep.subr.bf16.mxu0 0
          %303 = vmatpush1.bf16.msra.mxu0 0
          %304 = vmatprep.subr.bf16.mxu0 0
          %305 = vmatpush1.bf16.msra.mxu0 0
          %306 = vmatprep.subr.bf16.mxu0 0
          %307 = vmatpush1.bf16.msra.mxu0 0
          %308 = vmatprep.subr.bf16.mxu0 0
          %309 = vmatpush1.bf16.msra.mxu0 0
          %310 = vmatprep.subr.bf16.mxu0 0
          %311 = vmatpush1.bf16.msra.mxu0 0
          %312 = vmatprep.subr.bf16.mxu0 0
          %313 = vmatpush1.bf16.msra.mxu0 0
          %314 = vmatprep.subr.bf16.mxu0 0
          %315 = vmatpush1.bf16.msra.mxu0 0
          %316 = vmatprep.subr.bf16.mxu0 0
          %317 = vmatpush1.bf16.msra.mxu0 0
          %318 = vmatprep.subr.bf16.mxu0 0
          %319 = vmatpush1.bf16.msra.mxu0 0
          %320 = vmatprep.subr.bf16.mxu0 0
          %321 = vmatpush1.bf16.msra.mxu0 0
          %322 = vmatprep.subr.bf16.mxu0 0
          %323 = vmatpush1.bf16.msra.mxu0 0
          %324 = vmatprep.subr.bf16.mxu0 0
          %325 = vmatpush1.bf16.msra.mxu0 0
          %326 = vmatprep.mubr.bf16.mxu0 0
          %327 = vmatmul.mubr.bf16.gmra.mrb[0].mxu0 %v292
          %v328 = vpop.f32.mrb[0].mxu0
          %v329 = vadd.f32 %v277, %v328
          %v330 = vpop.f32.mrb[0].mxu0
          %v331 = vpop.f32.mrb[0].mxu0
          %v332 = vpop.f32.mrb[0].mxu0
          %333 = vdwg.mxu0
          %vm334 = vcmask 523264
          %v335 = vsel %vm334, %v329, 0.0
          %336 = vadd.xlane.f32.xlu0 %v335
          %v337 = vpop.xlane.xlu0 %336
          %v338 = vrcp.pop 64.0
          %v339 = vmul.f32 %v337, %v338
          %v340 = vsub.f32 %v329, %v339
          %v341 = vmul.f32 %v340, %v340
          %v342 = vsel %vm334, %v341, 0.0
          %343 = vadd.xlane.f32.xlu0 %v342
          %v344 = vpop.xlane.xlu0 %343
          %v345 = vmul.f32 %v344, %v338
          %v346 = vadd.f32 %v345, 1e-05
          %v347 = vrsqrt.pop %v346
          %v348 = vmul.f32 %v340, %v347
          %v349 = vlaneseq
          %v350 = vshrl.u32 %v349, 7
          %v351 = vsub.s32 1, %v350
          %v352 = vrot.slane %v264, %v351
          %v353 = vmul.f32 %v348, %v352
          %v354 = vlaneseq
          %v355 = vshrl.u32 %v354, 7
          %v356 = vsub.s32 2, %v355
          %v357 = vrot.slane %v264, %v356
          %v358 = vadd.f32 %v353, %v357
          %v359 = vmul.f32 %v358, %v358
          %v360 = vmul.f32 %v358, %v359
          %v361 = vmul.f32 %v360, 0.044715
          %v362 = vadd.f32 %v358, %v361
          %v363 = vmul.f32 %v362, 0.7978846
          %v364 = vtanh.pop %v363
          %v365 = vadd.f32 %v364, 1.0
          %v366 = vmul.f32 %v365, 0.5
          %v367 = vmul.f32 %v358, %v366
          %v368 = vpack.c.bf16 %v367, %v367
          %vm369 = vcmask 519168
          %370 = vst.msk [vmem:[#allocation2] sm:$0xf] %vm369, %v368
          %371 = vst.msk [vmem:[#allocation3] sm:$0xff] %vm334, 0.0
        $region52: #{tpu_custom_call.1} parent=35 // pred_fallthru
          _
        %v372 = vld [vmem:[#allocation2] sm:$0xf]
        %v373 = vld [vmem:[#allocation3] sm:$0xff]
        %v374 = vld [vmem:[#allocation9] sm:$0xf]
        %v375 = vld [vmem:[#allocation9 + $0x4] sm:$0xf]
        %v376 = vld [vmem:[#allocation9 + $0x8] sm:$0xf]
        %v377 = vld [vmem:[#allocation9 + $0xc] sm:$0xf]
        %v378 = vld [vmem:[#allocation9 + $0x10] sm:$0xf]
        %v379 = vld [vmem:[#allocation9 + $0x14] sm:$0xf]
        %v380 = vld [vmem:[#allocation9 + $0x18] sm:$0xf]
        %v381 = vld [vmem:[#allocation9 + $0x1c] sm:$0xf]
        %v390 = vunpack.c.l.b16 %v374
        %v391 = vunpack.c.l.b16 %v375
        %v392 = vunpack.c.l.b16 %v376
        %v393 = vunpack.c.l.b16 %v377
        %v394 = vunpack.c.l.b16 %v378
        %v395 = vunpack.c.l.b16 %v379
        %v396 = vunpack.c.l.b16 %v380
        %v397 = vunpack.c.l.b16 %v381
        %v398 = vpack.c.b16 %v391, %v390
        %v399 = vpack.c.b16 %v393, %v392
        %v400 = vpack.c.b16 %v395, %v394
        %v401 = vpack.c.b16 %v397, %v396
        %vm406 = vcmask 523264
        %v408 = vsel %vm406, %v372, 0
        %410 = vmatprep.subr.bf16.mxu0 0
        %411 = vmatpush1.bf16.msra.mxu0 %v398
        %412 = vmatprep.subr.bf16.mxu0 0
        %413 = vmatpush1.bf16.msra.mxu0 %v399
        %414 = vmatprep.subr.bf16.mxu0 0
        %415 = vmatpush1.bf16.msra.mxu0 %v400
        %416 = vmatprep.subr.bf16.mxu0 0
        %417 = vmatpush1.bf16.msra.mxu0 %v401
        %418 = vmatprep.subr.bf16.mxu0 0
        %419 = vmatpush1.bf16.msra.mxu0 0
        %420 = vmatprep.subr.bf16.mxu0 0
        %421 = vmatpush1.bf16.msra.mxu0 0
        %422 = vmatprep.subr.bf16.mxu0 0
        %423 = vmatpush1.bf16.msra.mxu0 0
        %424 = vmatprep.subr.bf16.mxu0 0
        %425 = vmatpush1.bf16.msra.mxu0 0
        %426 = vmatprep.subr.bf16.mxu0 0
        %427 = vmatpush1.bf16.msra.mxu0 0
        %428 = vmatprep.subr.bf16.mxu0 0
        %429 = vmatpush1.bf16.msra.mxu0 0
        %430 = vmatprep.subr.bf16.mxu0 0
        %431 = vmatpush1.bf16.msra.mxu0 0
        %432 = vmatprep.subr.bf16.mxu0 0
        %433 = vmatpush1.bf16.msra.mxu0 0
        %434 = vmatprep.subr.bf16.mxu0 0
        %435 = vmatpush1.bf16.msra.mxu0 0
        %436 = vmatprep.subr.bf16.mxu0 0
        %437 = vmatpush1.bf16.msra.mxu0 0
        %438 = vmatprep.subr.bf16.mxu0 0
        %439 = vmatpush1.bf16.msra.mxu0 0
        %440 = vmatprep.subr.bf16.mxu0 0
        %441 = vmatpush1.bf16.msra.mxu0 0
        %442 = vmatprep.mubr.bf16.mxu0 0
        %443 = vmatmul.mubr.bf16.gmra.mrb[0].mxu0 %v408
        %v444 = vpop.f32.mrb[0].mxu0
        %v445 = vadd.f32 0.0, %v444
        %v446 = vpop.f32.mrb[0].mxu0
        %v447 = vpop.f32.mrb[0].mxu0
        %v448 = vpop.f32.mrb[0].mxu0
        %449 = vdwg.mxu0
        %v450 = vadd.f32 %v373, %v445
        %451 = vst.msk [vmem:[#allocation3] sm:$0xff] %vm406, %v450
        // Predicated region
        $region53: #{tpu_custom_call.1} parent=35 // pred_check
          %p452 = pneg %p265
        $region54: #{tpu_custom_call.1} parent=35 // pred_check_branch
          %454 = sbr.rel (%p452) target = $region56
        $region55: #{tpu_custom_call.1} parent=35 // pred_region
          %v455 = vld [vmem:[#allocation3] sm:$0xff]
          %v456 = vlaneseq
          %v457 = vshrl.u32 %v456, 7
          %v458 = vsub.s32 3, %v457
          %v459 = vrot.slane %v264, %v458
          %v460 = vadd.f32 %v455, %v459
          %v461 = vsel %vm406, %v460, 0.0
          %462 = vadd.xlane.f32.xlu0 %v461
          %v463 = vpop.xlane.xlu0 %462
          %v464 = vrcp.pop 64.0
          %v465 = vmul.f32 %v463, %v464
          %v466 = vsub.f32 %v460, %v465
          %v467 = vmul.f32 %v466, %v466
          %v468 = vsel %vm406, %v467, 0.0
          %469 = vadd.xlane.f32.xlu0 %v468
          %v470 = vpop.xlane.xlu0 %469
          %v471 = vmul.f32 %v470, %v464
          %v472 = vadd.f32 %v471, 1e-05
          %v473 = vrsqrt.pop %v472
          %v474 = vmul.f32 %v466, %v473
          %v475 = vlaneseq
          %v476 = vshrl.u32 %v475, 7
          %v477 = vsub.s32 4, %v476
          %v478 = vrot.slane %v264, %v477
          %v479 = vmul.f32 %v474, %v478
          %v480 = vlaneseq
          %v481 = vshrl.u32 %v480, 7
          %v482 = vsub.s32 5, %v481
          %v483 = vrot.slane %v264, %v482
          %v484 = vadd.f32 %v479, %v483
          %485 = vst.msk [vmem:[%s261] sm:$0xff] %vm406, %v484
        $region56: #{tpu_custom_call.1} parent=35 // pred_fallthru
          _
        %s486 = sand.u32 %s136, 1
        %s487 = scalar_lea.sflag [#allocation6], %s486
        %s488 = sand.u32 %s136, 1
        %s489 = smul.addr %s488, 8
        %s490 = scalar_lea.vmem [#allocation10], %s489
        // Predicated region
        $region57: #{tpu_custom_call.1} parent=35 // pred_check
          %p491 = pneg %p146
        $region58: #{tpu_custom_call.1} parent=35 // pred_check_branch
          %493 = sbr.rel (%p491) target = $region60
        $region59: #{tpu_custom_call.1} parent=35 // pred_region
          %s495 = ssub.s32 128, 128
          %496 = vsyncadd %s487, %s495
          %s497 = smul.addr %s26, 128
          %s498 = scalar_lea.hbm %s4, %s497
          %s500 = sshll.u32 %s490, 4
          %s501 = int_to_ptr.vmem [resolvable:$true] %s500
          %503 = dma.vmem_to_hbm [thread:$0]  %s501, 128, %s498, %s487
        $region60: #{tpu_custom_call.1} parent=35 // pred_fallthru
          _
      $region36: #{tpu_custom_call.1} parent=5 // pred_fallthru
        _
      %p504 = scmp.le.s32.totalorder 2, %s17
      // Predicated region
      $region61: #{tpu_custom_call.1} parent=5 // pred_check
        %p505 = pneg %p504
      $region62: #{tpu_custom_call.1} parent=5 // pred_check_branch
        %507 = sbr.rel (%p505) target = $region64
      $region63: #{tpu_custom_call.1} parent=5 // pred_region
        %s508 = ssub.s32 %s17, 2
        // Predicated region
        $region65: #{tpu_custom_call.1} parent=63 // pred_check
          %p509 = pneg %p152
        $region66: #{tpu_custom_call.1} parent=63 // pred_check_branch
          %511 = sbr.rel (%p509) target = $region68
        $region67: #{tpu_custom_call.1} parent=63 // pred_region
          %s512 = sand.u32 %s137, 1
          %s513 = scalar_lea.sflag [#allocation6], %s512
          %s514 = sand.u32 %s137, 1
          %s515 = smul.addr %s514, 8
          %s516 = scalar_lea.vmem [#allocation10], %s515
          %517 = dma.done %s513, 128
        $region68: #{tpu_custom_call.1} parent=63 // pred_fallthru
          _
      $region64: #{tpu_custom_call.1} parent=5 // pred_fallthru
        _
    $region6: #{tpu_custom_call.1} parent=1 // loop_footer
      %s21 = sadd.s32 1, %s17
    $region7: #{tpu_custom_call.1} parent=1 // loop_footer_branch
      %16 = sbr.rel target = $region3
    $region8: #{tpu_custom_call.1} parent=1 // loop_exit
      _
    %518 = vsyncpa [#allocation5], 1
    %s519 = scalar_lea.sflag [#allocation5], 1
    %520 = vsyncpa %s519, 1
    %521 = vsyncpa [#allocation8], 1
    %522 = vsyncpa [#allocation6], 1
    %s523 = scalar_lea.sflag [#allocation6], 1
    %524 = vsyncpa %s523, 1

</llo_original>
